<compile_context>
chip_gen: v5e
topology: v5e:2x2
jax: 0.10.0
libtpu: 0.0.40
codegen_flags: <defaults>
</compile_context>

<pallas_src>
import functools

import jax
import jax.numpy as jnp
import numpy as np
from jax.experimental import pallas as pl
from jax.experimental.pallas import tpu as pltpu


def _fm_kernel(offsets_ref, bias_ref, table_ref, idx_ref, out_ref):
    """One batch tile.

    offsets_ref : (F,)     i32 in SMEM  (per-field vocab offsets)
    bias_ref    : (1,)     f32 in SMEM
    table_ref   : (D+2, N) f32 in VMEM  (emb^T | fc^T | sum_d emb^2)
    idx_ref     : (F, TB)  i32 in VMEM  (raw field indices, batch on lanes)
    out_ref     : (1, TB)  f32 in VMEM  (sigmoid(linear + fm))
    """
    table = table_ref[...]                           # (D+2, N) f32
    idx = idx_ref[...]                               # (F, TB)  i32

    dp2, n_rows = table.shape
    d = dp2 - 2
    f_dim, tb = idx.shape

    # Multi-hot RHS: one VPU compare+add per field, single MXU push total.
    row_iota = jax.lax.broadcasted_iota(jnp.int32, (n_rows, tb), 0)  # (N, TB)
    multihot = jnp.zeros((n_rows, tb), jnp.float32)
    for f in range(f_dim):                           # F is tiny & static
        idx_f = idx[f:f + 1, :] + offsets_ref[f]     # (1, TB), offset add fused
        multihot = multihot + (row_iota == idx_f).astype(jnp.float32)

    # Gather-and-reduce-over-fields in one matmul; HIGHEST keeps the f32 table
    # un-rounded (true-gather accuracy). Out-of-range indices would silently
    # contribute zero rows (unlike PyTorch's index error) - inputs must be valid.
    acc = jnp.dot(table, multihot,
                  preferred_element_type=jnp.float32,
                  precision=jax.lax.Precision.HIGHEST)               # (D+2, TB)

    emb_sum = acc[:d, :]                             # (D, TB) sum_f emb_f
    lin = acc[d:d + 1, :]                            # (1, TB) sum_f fc[idx_f]
    sum_sq = acc[d + 1:d + 2, :]                     # (1, TB) sum_f sum_d emb_f^2

    ix = jnp.sum(emb_sum * emb_sum, axis=0, keepdims=True) - sum_sq  # (1, TB)
    z = lin + bias_ref[0] + 0.5 * ix                                 # (1, TB)
    out_ref[...] = jax.nn.sigmoid(z)


def fm_pallas(idx_t, combined_table, bias, offsets, *, block_b):
    """idx_t: (F, B_pad) i32, combined_table: (D+2, N) f32,
    bias: (1,) f32, offsets: (F,) i32."""
    f_dim, b_pad = idx_t.shape
    dp2, n_rows = combined_table.shape
    assert b_pad % block_b == 0 and block_b % 128 == 0
    grid = (b_pad // block_b,)

    # Single matmul per example + a handful of elementwise ops.
    flops = 2 * b_pad * dp2 * n_rows + 6 * b_pad * dp2
    bytes_accessed = (idx_t.size * 4
                      + combined_table.size * combined_table.dtype.itemsize
                      + b_pad * 4 + f_dim * 4 + 4)

    return pl.pallas_call(
        _fm_kernel,
        out_shape=jax.ShapeDtypeStruct((1, b_pad), jnp.float32),
        grid=grid,
        in_specs=[
            pl.BlockSpec(memory_space=pltpu.SMEM),                 # offsets (F,)
            pl.BlockSpec(memory_space=pltpu.SMEM),                 # bias (1,)
            pl.BlockSpec((dp2, n_rows), lambda i: (0, 0)),         # table, resident
            pl.BlockSpec((f_dim, block_b), lambda i: (0, i)),      # idx batch tile
        ],
        out_specs=pl.BlockSpec((1, block_b), lambda i: (0, i)),    # lane-dense out
        compiler_params=pltpu.CompilerParams(
            dimension_semantics=("parallel",)),
        cost_estimate=pl.CostEstimate(
            flops=flops, transcendentals=b_pad, bytes_accessed=bytes_accessed),
    )(offsets, bias, combined_table, idx_t)


@functools.partial(jax.jit, static_argnames=("block_b",))
def fm_forward(x_idx, emb_weight, fc_weight, bias, offsets, *, block_b=2048):
    b, f_dim = x_idx.shape

    emb = emb_weight.astype(jnp.float32)             # (N, D)
    # Combined table: emb^T | fc^T | per-row sum of squared embeddings.
    combined = jnp.concatenate(
        [emb.T,                                      # (D, N)
         fc_weight.astype(jnp.float32).T,            # (1, N)
         jnp.sum(emb * emb, axis=1)[None, :]],       # (1, N)
        axis=0)                                      # (D+2, N)

    # Tile size: multiple of 128, large to amortize ~0.35us/step overhead,
    # but clamped so the grid keeps >=2 steps when B allows (v7x megacore).
    tb = max(128, min(block_b, 128 * pl.cdiv(b, 256)))
    b_pad = tb * pl.cdiv(b, tb)

    # Batch on lanes; pad with index 0 (always a valid row since offsets[0]=0);
    # padded lanes are computed then dropped.  Offset add happens in-kernel.
    idx_t = jnp.zeros((f_dim, b_pad), jnp.int32).at[:, :b].set(
        x_idx.astype(jnp.int32).T)

    out = fm_pallas(idx_t, combined, bias.astype(jnp.float32),
                    offsets.astype(jnp.int32), block_b=tb)
    return out[0, :b]                                # (B,) == sigmoid(x.squeeze(1))


def fm_reference(x_idx, emb_weight, fc_weight, bias, offsets):
    idx = x_idx + offsets[None, :]
    emb = emb_weight[idx]
    lin = fc_weight[idx][..., 0]
    square_of_sum = jnp.sum(emb, axis=1) ** 2
    sum_of_square = jnp.sum(emb ** 2, axis=1)
    ix = jnp.sum(square_of_sum - sum_of_square, axis=1, keepdims=True)
    linear = jnp.sum(lin, axis=1, keepdims=True) + bias
    return jax.nn.sigmoid((linear + 0.5 * ix)[:, 0])


if __name__ == "__main__":
    # Small, forward-consistent shapes.
    field_dims = (10, 20, 15, 5)            # F = 4 fields
    embed_dim = 32
    batch = 8
    num_embeddings = sum(field_dims)
    offsets = jnp.asarray(
        np.array((0, *np.cumsum(field_dims)[:-1]), dtype=np.int32))

    key = jax.random.PRNGKey(0)
    k_emb, k_fc, k_x = jax.random.split(key, 3)

    # Embedding weight: xavier_uniform_ over (num_embeddings, embed_dim).
    bound = float(np.sqrt(6.0 / (num_embeddings + embed_dim)))
    emb_weight = jax.random.uniform(
        k_emb, (num_embeddings, embed_dim), jnp.float32, -bound, bound)
    # FeaturesLinear fc: nn.Embedding default init ~ N(0, 1), output_dim=1.
    fc_weight = jax.random.normal(k_fc, (num_embeddings, 1), jnp.float32)
    bias = jnp.zeros((1,), jnp.float32)

    # Integer feature indices, valid per field.
    cols = []
    for i, fd in enumerate(field_dims):
        cols.append(jax.random.randint(
            jax.random.fold_in(k_x, i), (batch,), 0, fd, jnp.int32))
    x_idx = jnp.stack(cols, axis=1)          # (B, F) int32

    out = fm_forward(x_idx, emb_weight, fc_weight, bias, offsets)
    out = jax.block_until_ready(out)

    ref = fm_reference(x_idx, emb_weight, fc_weight, bias, offsets)
    assert out.shape == (batch,)
    assert jnp.allclose(out, ref, atol=1e-5, rtol=1e-5)
    print("KERNEL_OK")
</pallas_src>

<mosaic_0001>
module attributes {stable_mosaic.version = 11 : i64} {
  func.func @_fm_kernel(%arg0: i32, %arg1: memref<4xi32, #tpu.memory_space<smem>>, %arg2: memref<1xf32, #tpu.memory_space<smem>>, %arg3: memref<34x50xf32, #tpu.memory_space<vmem>>, %arg4: memref<4x128xi32, #tpu.memory_space<vmem>>, %arg5: memref<1x128xf32, #tpu.memory_space<vmem>>) attributes {dimension_semantics = [#tpu.dimension_semantics<parallel>], iteration_bounds = array<i64: 1>, scalar_prefetch = 0 : i64, scratch_operands = 0 : i64, tpu.core_type = #tpu.core_type<tc>, window_params = [{transform_indices = @transform_0, window_bounds = array<i64: 4>}, {transform_indices = @transform_1, window_bounds = array<i64: 1>}, {pipeline_mode = #tpu.pipeline_mode<synchronous>, transform_indices = @transform_2, window_bounds = array<i64: 34, 50>}, {transform_indices = @transform_3, window_bounds = array<i64: 4, 128>}, {transform_indices = @transform_4, window_bounds = array<i64: 1, 128>}]} {
    %c0 = arith.constant 0 : index
    %c0_0 = arith.constant 0 : index
    %0 = vector.load %arg3[%c0, %c0_0] : memref<34x50xf32, #tpu.memory_space<vmem>>, vector<34x50xf32>
    %c0_1 = arith.constant 0 : index
    %c0_2 = arith.constant 0 : index
    %1 = vector.load %arg4[%c0_1, %c0_2] : memref<4x128xi32, #tpu.memory_space<vmem>>, vector<4x128xi32>
    %2 = tpu.iota {dimensions = array<i32: 0>} : vector<50x128xi32>
    %cst = arith.constant 0.000000e+00 : f32
    %3 = vector.broadcast %cst : f32 to vector<50x128xf32>
    %4 = vector.extract_strided_slice %1 {offsets = [0, 0], sizes = [1, 128], strides = [1, 1]} : vector<4x128xi32> to vector<1x128xi32>
    %c0_3 = arith.constant 0 : index
    %5 = memref.load %arg1[%c0_3] : memref<4xi32, #tpu.memory_space<smem>>
    %6 = vector.broadcast %5 : i32 to vector<1x128xi32>
    %7 = arith.addi %4, %6 : vector<1x128xi32>
    %8 = vector.broadcast %7 : vector<1x128xi32> to vector<50x128xi32>
    %9 = arith.cmpi eq, %2, %8 : vector<50x128xi32>
    %10 = arith.extui %9 : vector<50x128xi1> to vector<50x128xi32>
    %11 = arith.sitofp %10 : vector<50x128xi32> to vector<50x128xf32>
    %12 = arith.addf %3, %11 : vector<50x128xf32>
    %13 = vector.extract_strided_slice %1 {offsets = [1, 0], sizes = [1, 128], strides = [1, 1]} : vector<4x128xi32> to vector<1x128xi32>
    %c1 = arith.constant 1 : index
    %14 = memref.load %arg1[%c1] : memref<4xi32, #tpu.memory_space<smem>>
    %15 = vector.broadcast %14 : i32 to vector<1x128xi32>
    %16 = arith.addi %13, %15 : vector<1x128xi32>
    %17 = vector.broadcast %16 : vector<1x128xi32> to vector<50x128xi32>
    %18 = arith.cmpi eq, %2, %17 : vector<50x128xi32>
    %19 = arith.extui %18 : vector<50x128xi1> to vector<50x128xi32>
    %20 = arith.sitofp %19 : vector<50x128xi32> to vector<50x128xf32>
    %21 = arith.addf %12, %20 : vector<50x128xf32>
    %22 = vector.extract_strided_slice %1 {offsets = [2, 0], sizes = [1, 128], strides = [1, 1]} : vector<4x128xi32> to vector<1x128xi32>
    %c2 = arith.constant 2 : index
    %23 = memref.load %arg1[%c2] : memref<4xi32, #tpu.memory_space<smem>>
    %24 = vector.broadcast %23 : i32 to vector<1x128xi32>
    %25 = arith.addi %22, %24 : vector<1x128xi32>
    %26 = vector.broadcast %25 : vector<1x128xi32> to vector<50x128xi32>
    %27 = arith.cmpi eq, %2, %26 : vector<50x128xi32>
    %28 = arith.extui %27 : vector<50x128xi1> to vector<50x128xi32>
    %29 = arith.sitofp %28 : vector<50x128xi32> to vector<50x128xf32>
    %30 = arith.addf %21, %29 : vector<50x128xf32>
    %31 = vector.extract_strided_slice %1 {offsets = [3, 0], sizes = [1, 128], strides = [1, 1]} : vector<4x128xi32> to vector<1x128xi32>
    %c3 = arith.constant 3 : index
    %32 = memref.load %arg1[%c3] : memref<4xi32, #tpu.memory_space<smem>>
    %33 = vector.broadcast %32 : i32 to vector<1x128xi32>
    %34 = arith.addi %31, %33 : vector<1x128xi32>
    %35 = vector.broadcast %34 : vector<1x128xi32> to vector<50x128xi32>
    %36 = arith.cmpi eq, %2, %35 : vector<50x128xi32>
    %37 = arith.extui %36 : vector<50x128xi1> to vector<50x128xi32>
    %38 = arith.sitofp %37 : vector<50x128xi32> to vector<50x128xf32>
    %39 = arith.addf %30, %38 : vector<50x128xf32>
    %cst_4 = arith.constant dense<0.000000e+00> : vector<34x128xf32>
    %40 = tpu.matmul %0, %39, %cst_4 {dimension_numbers = #tpu.dot_dimension_numbers<[1], [0], [0], [1], [0, 0, 1, 1], [], []>, precision = #tpu.contract_precision<fp32>} : vector<34x50xf32>, vector<50x128xf32>, vector<34x128xf32> -> vector<34x128xf32>
    %41 = vector.extract_strided_slice %40 {offsets = [0, 0], sizes = [32, 128], strides = [1, 1]} : vector<34x128xf32> to vector<32x128xf32>
    %42 = vector.extract_strided_slice %40 {offsets = [32, 0], sizes = [1, 128], strides = [1, 1]} : vector<34x128xf32> to vector<1x128xf32>
    %43 = vector.extract_strided_slice %40 {offsets = [33, 0], sizes = [1, 128], strides = [1, 1]} : vector<34x128xf32> to vector<1x128xf32>
    %44 = arith.mulf %41, %41 : vector<32x128xf32>
    %cst_5 = arith.constant dense<0.000000e+00> : vector<128xf32>
    %45 = vector.multi_reduction <add>, %44, %cst_5 [0] : vector<32x128xf32> to vector<128xf32>
    %46 = vector.shape_cast %45 : vector<128xf32> to vector<1x128xf32>
    %47 = arith.subf %46, %43 : vector<1x128xf32>
    %c0_6 = arith.constant 0 : index
    %48 = memref.load %arg2[%c0_6] : memref<1xf32, #tpu.memory_space<smem>>
    %49 = vector.broadcast %48 : f32 to vector<1x128xf32>
    %50 = arith.addf %42, %49 : vector<1x128xf32>
    %cst_7 = arith.constant 5.000000e-01 : f32
    %51 = vector.broadcast %cst_7 : f32 to vector<1x128xf32>
    %52 = arith.mulf %51, %47 : vector<1x128xf32>
    %53 = arith.addf %50, %52 : vector<1x128xf32>
    %54 = arith.negf %53 : vector<1x128xf32>
    %55 = math.exp %54 : vector<1x128xf32>
    %cst_8 = arith.constant 1.000000e+00 : f32
    %56 = vector.broadcast %cst_8 : f32 to vector<1x128xf32>
    %57 = arith.addf %56, %55 : vector<1x128xf32>
    %58 = arith.divf %56, %57 : vector<1x128xf32>
    %c0_9 = arith.constant 0 : index
    %c0_10 = arith.constant 0 : index
    %59 = vector.load %arg5[%c0_9, %c0_10] : memref<1x128xf32, #tpu.memory_space<vmem>>, vector<1x128xf32>
    tpu.vector_store %arg5[%c0_9, %c0_10], %58 {strides = array<i32>} : memref<1x128xf32, #tpu.memory_space<vmem>>, vector<1x128xf32>,
    return
  }
  func.func @transform_0(%arg0: i32) -> i32 {
    %c0_i32 = arith.constant 0 : i32
    %c0_i32_0 = arith.constant 0 : i32
    return %c0_i32 : i32
  }
  func.func @transform_1(%arg0: i32) -> i32 {
    %c0_i32 = arith.constant 0 : i32
    %c0_i32_0 = arith.constant 0 : i32
    return %c0_i32 : i32
  }
  func.func @transform_2(%arg0: i32) -> (i32, i32) {
    %c0_i32 = arith.constant 0 : i32
    %c0_i32_0 = arith.constant 0 : i32
    %c0_i32_1 = arith.constant 0 : i32
    return %c0_i32, %c0_i32_0 : i32, i32
  }
  func.func @transform_3(%arg0: i32) -> (i32, i32) {
    %c0_i32 = arith.constant 0 : i32
    %c0_i32_0 = arith.constant 0 : i32
    return %c0_i32, %arg0 : i32, i32
  }
  func.func @transform_4(%arg0: i32) -> (i32, i32) {
    %c0_i32 = arith.constant 0 : i32
    %c0_i32_0 = arith.constant 0 : i32
    return %c0_i32, %arg0 : i32, i32
  }
}

</mosaic_0001>

<llo_original>
// kernel: fm_forward.1
$region0: #{fm_forward.1}
  #allocation0 [shape = 'u32[]', space=smem, size = 0x4, offset = 0x4, fixed_abs, tag = 'smem constant byte address 0x4 - core index']
  #allocation1 [shape = 'u32[72,128]{1,0:T(1,128)}', space=vmem, size = 0x9000, scoped, tag = 'internal scratch']
  #allocation2 [shape = 'f32[1]{0:T(128)S(6)}', space=smem, size = 0x200, scoped, tag = 'scoped memory for fm_forward.1']
  %s0 = inlined_call_operand.vmem [shape: s32[4], index: 0, kind: input, shape index: {}]
  %s1 = inlined_call_operand.<no memory space> [shape: f32[1], index: 1, kind: input, shape index: {}]
  %s2 = inlined_call_operand.vmem [shape: f32[34,50], index: 2, kind: input, shape index: {}]
  %s3 = inlined_call_operand.vmem [shape: s32[4,128], index: 3, kind: input, shape index: {}]
  %s4 = inlined_call_operand.vmem [shape: f32[1,128], index: 4, kind: output, shape index: {}]
  %s5 = sld [smem:[#allocation0]]
  $region30: #{fm_forward.1} parent=0
    _
  %s7 = ssub.s32 1, %s5
  %s8 = scalar_select 0, %s7, %s5
  %9 = sst [smem:[#allocation2]] %s1
  $region1: #{fm_forward.1} parent=0
    #allocation3 [shape = 'u8[512]{0}', space=smem, size = 0x200, scoped, tag = 'input window, operand 0, single buffered']
    #allocation4 [shape = 's32[1]{0}', space=sflag, size = 0x4, scoped, tag = 'scoped memory for fm_forward.1']
    %10 = vsyncpa [#allocation4], 0
    // Predicated region
    $region2: #{fm_forward.1} parent=1 // pred_check
      _
    $region3: #{fm_forward.1} parent=1 // pred_check_branch
      %12 = sbr.rel (0) target = $region5
    $region4: #{fm_forward.1} parent=1 // pred_region
      %14 = vsyncadd [#allocation4], 0
      %s16 = sshll.u32 %s0, 4
      %s17 = int_to_ptr.vmem [resolvable:$true] %s16
      %19 = dma.vmem_to_smem %s17, 16, [#allocation3], [#allocation4]
    $region5: #{fm_forward.1} parent=1 // pred_fallthru
      _
    // Predicated region
    $region6: #{fm_forward.1} parent=1 // pred_check
      _
    $region7: #{fm_forward.1} parent=1 // pred_check_branch
      %21 = sbr.rel (0) target = $region9
    $region8: #{fm_forward.1} parent=1 // pred_region
      _
    $region9: #{fm_forward.1} parent=1 // pred_fallthru
      _
    // Predicated region
    $region10: #{fm_forward.1} parent=1 // pred_check
      _
    $region11: #{fm_forward.1} parent=1 // pred_check_branch
      %23 = sbr.rel (0) target = $region13
    $region12: #{fm_forward.1} parent=1 // pred_region
      _
    $region13: #{fm_forward.1} parent=1 // pred_fallthru
      _
    // Predicated region
    $region14: #{fm_forward.1} parent=1 // pred_check
      _
    $region15: #{fm_forward.1} parent=1 // pred_check_branch
      %25 = sbr.rel (0) target = $region17
    $region16: #{fm_forward.1} parent=1 // pred_region
      _
    $region17: #{fm_forward.1} parent=1 // pred_fallthru
      _
    // Predicated region
    $region18: #{fm_forward.1} parent=1 // pred_check
      _
    $region19: #{fm_forward.1} parent=1 // pred_check_branch
      %27 = sbr.rel (0) target = $region21
    $region20: #{fm_forward.1} parent=1 // pred_region
      %29 = dma.done [#allocation4], 16
    $region21: #{fm_forward.1} parent=1 // pred_fallthru
      _
    %30 = sfence
    %v31 = vld [vmem:[%s2] sm:$0xff]
    %v32 = vld [vmem:[%s2 + $0x8] sm:$0xff]
    %v33 = vld [vmem:[%s2 + $0x10] sm:$0xff]
    %v34 = vld [vmem:[%s2 + $0x18] sm:$0xff]
    %v35 = vld [vmem:[%s2 + $0x20] sm:$0x3]
    %v36 = vld [vmem:[%s3] sm:$0xf]
    %v37 = vlaneseq
    %v38 = vshrl.u32 %v37, 7
    %v39 = vadd.s32 %v38, 8
    %v40 = vadd.s32 %v38, 16
    %v41 = vadd.s32 %v38, 24
    %v42 = vadd.s32 %v38, 32
    %v43 = vadd.s32 %v38, 40
    %v44 = vadd.s32 %v38, 48
    %s45 = sld [smem:[#allocation3]]
    %v46 = vstv %s45
    %v47 = vadd.s32 %v36, %v46
    %v48 = vperm.slane %v47, 0
    %vm49 = vcmp.eq.s32.totalorder %v38, %v48
    %vm50 = vcmp.eq.s32.totalorder %v39, %v48
    %vm51 = vcmp.eq.s32.totalorder %v40, %v48
    %vm52 = vcmp.eq.s32.totalorder %v41, %v48
    %vm53 = vcmp.eq.s32.totalorder %v42, %v48
    %vm54 = vcmp.eq.s32.totalorder %v43, %v48
    %vm55 = vcmp.eq.s32.totalorder %v44, %v48
    %v56 = vsel %vm49, 1, 0
    %v57 = vsel %vm50, 1, 0
    %v58 = vsel %vm51, 1, 0
    %v59 = vsel %vm52, 1, 0
    %v60 = vsel %vm53, 1, 0
    %v61 = vsel %vm54, 1, 0
    %v62 = vsel %vm55, 1, 0
    %v63 = vcvt.s32.f32 %v56
    %v64 = vcvt.s32.f32 %v57
    %v65 = vcvt.s32.f32 %v58
    %v66 = vcvt.s32.f32 %v59
    %v67 = vcvt.s32.f32 %v60
    %v68 = vcvt.s32.f32 %v61
    %v69 = vcvt.s32.f32 %v62
    %v70 = vadd.f32 %v63, 0.0
    %v71 = vadd.f32 %v64, 0.0
    %v72 = vadd.f32 %v65, 0.0
    %v73 = vadd.f32 %v66, 0.0
    %v74 = vadd.f32 %v67, 0.0
    %v75 = vadd.f32 %v68, 0.0
    %v76 = vadd.f32 %v69, 0.0
    %s77 = sld [smem:[#allocation3 + $0x1]]
    %v78 = vstv %s77
    %v79 = vadd.s32 %v36, %v78
    %v80 = vperm.slane %v79, 1
    %vm81 = vcmp.eq.s32.totalorder %v38, %v80
    %vm82 = vcmp.eq.s32.totalorder %v39, %v80
    %vm83 = vcmp.eq.s32.totalorder %v40, %v80
    %vm84 = vcmp.eq.s32.totalorder %v41, %v80
    %vm85 = vcmp.eq.s32.totalorder %v42, %v80
    %vm86 = vcmp.eq.s32.totalorder %v43, %v80
    %vm87 = vcmp.eq.s32.totalorder %v44, %v80
    %v88 = vsel %vm81, 1, 0
    %v89 = vsel %vm82, 1, 0
    %v90 = vsel %vm83, 1, 0
    %v91 = vsel %vm84, 1, 0
    %v92 = vsel %vm85, 1, 0
    %v93 = vsel %vm86, 1, 0
    %v94 = vsel %vm87, 1, 0
    %v95 = vcvt.s32.f32 %v88
    %v96 = vcvt.s32.f32 %v89
    %v97 = vcvt.s32.f32 %v90
    %v98 = vcvt.s32.f32 %v91
    %v99 = vcvt.s32.f32 %v92
    %v100 = vcvt.s32.f32 %v93
    %v101 = vcvt.s32.f32 %v94
    %v102 = vadd.f32 %v70, %v95
    %v103 = vadd.f32 %v71, %v96
    %v104 = vadd.f32 %v72, %v97
    %v105 = vadd.f32 %v73, %v98
    %v106 = vadd.f32 %v74, %v99
    %v107 = vadd.f32 %v75, %v100
    %v108 = vadd.f32 %v76, %v101
    %s109 = sld [smem:[#allocation3 + $0x2]]
    %v110 = vstv %s109
    %v111 = vadd.s32 %v36, %v110
    %v112 = vperm.slane %v111, 2
    %vm113 = vcmp.eq.s32.totalorder %v38, %v112
    %vm114 = vcmp.eq.s32.totalorder %v39, %v112
    %vm115 = vcmp.eq.s32.totalorder %v40, %v112
    %vm116 = vcmp.eq.s32.totalorder %v41, %v112
    %vm117 = vcmp.eq.s32.totalorder %v42, %v112
    %vm118 = vcmp.eq.s32.totalorder %v43, %v112
    %vm119 = vcmp.eq.s32.totalorder %v44, %v112
    %v120 = vsel %vm113, 1, 0
    %v121 = vsel %vm114, 1, 0
    %v122 = vsel %vm115, 1, 0
    %v123 = vsel %vm116, 1, 0
    %v124 = vsel %vm117, 1, 0
    %v125 = vsel %vm118, 1, 0
    %v126 = vsel %vm119, 1, 0
    %v127 = vcvt.s32.f32 %v120
    %v128 = vcvt.s32.f32 %v121
    %v129 = vcvt.s32.f32 %v122
    %v130 = vcvt.s32.f32 %v123
    %v131 = vcvt.s32.f32 %v124
    %v132 = vcvt.s32.f32 %v125
    %v133 = vcvt.s32.f32 %v126
    %v134 = vadd.f32 %v102, %v127
    %v135 = vadd.f32 %v103, %v128
    %v136 = vadd.f32 %v104, %v129
    %v137 = vadd.f32 %v105, %v130
    %v138 = vadd.f32 %v106, %v131
    %v139 = vadd.f32 %v107, %v132
    %v140 = vadd.f32 %v108, %v133
    %s141 = sld [smem:[#allocation3 + $0x3]]
    %v142 = vstv %s141
    %v143 = vadd.s32 %v36, %v142
    %v144 = vperm.slane %v143, 3
    %vm145 = vcmp.eq.s32.totalorder %v38, %v144
    %vm146 = vcmp.eq.s32.totalorder %v39, %v144
    %vm147 = vcmp.eq.s32.totalorder %v40, %v144
    %vm148 = vcmp.eq.s32.totalorder %v41, %v144
    %vm149 = vcmp.eq.s32.totalorder %v42, %v144
    %vm150 = vcmp.eq.s32.totalorder %v43, %v144
    %vm151 = vcmp.eq.s32.totalorder %v44, %v144
    %v152 = vsel %vm145, 1, 0
    %v153 = vsel %vm146, 1, 0
    %v154 = vsel %vm147, 1, 0
    %v155 = vsel %vm148, 1, 0
    %v156 = vsel %vm149, 1, 0
    %v157 = vsel %vm150, 1, 0
    %v158 = vsel %vm151, 1, 0
    %v159 = vcvt.s32.f32 %v152
    %v160 = vcvt.s32.f32 %v153
    %v161 = vcvt.s32.f32 %v154
    %v162 = vcvt.s32.f32 %v155
    %v163 = vcvt.s32.f32 %v156
    %v164 = vcvt.s32.f32 %v157
    %v165 = vcvt.s32.f32 %v158
    %v166 = vadd.f32 %v134, %v159
    %v167 = vadd.f32 %v135, %v160
    %v168 = vadd.f32 %v136, %v161
    %v169 = vadd.f32 %v137, %v162
    %v170 = vadd.f32 %v138, %v163
    %v171 = vadd.f32 %v139, %v164
    %v172 = vadd.f32 %v140, %v165
    %vm173 = vcmask 408576
    %v175 = vsel %vm173, %v31, 0
    %v178 = vsel %vm173, %v32, 0
    %v181 = vsel %vm173, %v33, 0
    %v184 = vsel %vm173, %v34, 0
    %v187 = vsel %vm173, %v35, 0
    %vm189 = vcmask 1041408
    %v191 = vsel %vm189, %v172, 0
    %193 = vmatpush.msra.mxu0 0.0
    %194 = vmatpush.msra.mxu0 0.0
    %195 = vmatpush.msra.mxu0 0.0
    %196 = vmatpush.msra.mxu0 0.0
    %197 = vmatpush.msra.mxu0 0.0
    %198 = vmatpush.msra.mxu0 0.0
    %199 = vmatpush.msra.mxu0 0.0
    %200 = vmatpush.msra.mxu0 0.0
    %201 = vmatpush.msra.mxu0 0.0
    %v202 = vand.u32 %v191, 4294901760
    %203 = vmatpush.msra.mxu0 %v202
    %v204 = vand.u32 %v171, 4294901760
    %205 = vmatpush.msra.mxu0 %v204
    %v206 = vand.u32 %v170, 4294901760
    %207 = vmatpush.msra.mxu0 %v206
    %v208 = vand.u32 %v169, 4294901760
    %209 = vmatpush.msra.mxu0 %v208
    %v210 = vand.u32 %v168, 4294901760
    %211 = vmatpush.msra.mxu0 %v210
    %v212 = vand.u32 %v167, 4294901760
    %213 = vmatpush.msra.mxu0 %v212
    %v214 = vand.u32 %v166, 4294901760
    %215 = vmatpush.msra.mxu0 %v214
    %v216 = vand.u32 %v175, 4294901760
    %v217 = vsub.f32 %v175, %v216
    %v218 = vand.u32 %v217, 4294901760
    %v219 = vsub.f32 %v217, %v218
    %v220 = vand.u32 %v219, 4294901760
    %221 = vmatmul.f32.gmra.mxu0 %v220
    %v222 = vpop.f32.mrf.mxu0
    %v223 = vadd.f32 0.0, %v222
    %v224 = vand.u32 %v178, 4294901760
    %v225 = vsub.f32 %v178, %v224
    %v226 = vand.u32 %v225, 4294901760
    %v227 = vsub.f32 %v225, %v226
    %v228 = vand.u32 %v227, 4294901760
    %229 = vmatmul.f32.gmra.mxu0 %v228
    %v230 = vpop.f32.mrf.mxu0
    %v231 = vadd.f32 0.0, %v230
    %v232 = vand.u32 %v181, 4294901760
    %v233 = vsub.f32 %v181, %v232
    %v234 = vand.u32 %v233, 4294901760
    %v235 = vsub.f32 %v233, %v234
    %v236 = vand.u32 %v235, 4294901760
    %237 = vmatmul.f32.gmra.mxu0 %v236
    %v238 = vpop.f32.mrf.mxu0
    %v239 = vadd.f32 0.0, %v238
    %v240 = vand.u32 %v184, 4294901760
    %v241 = vsub.f32 %v184, %v240
    %v242 = vand.u32 %v241, 4294901760
    %v243 = vsub.f32 %v241, %v242
    %v244 = vand.u32 %v243, 4294901760
    %245 = vmatmul.f32.gmra.mxu0 %v244
    %v246 = vpop.f32.mrf.mxu0
    %v247 = vadd.f32 0.0, %v246
    %v248 = vand.u32 %v187, 4294901760
    %v249 = vsub.f32 %v187, %v248
    %v250 = vand.u32 %v249, 4294901760
    %v251 = vsub.f32 %v249, %v250
    %v252 = vand.u32 %v251, 4294901760
    %253 = vmatmul.f32.gmra.mxu0 %v252
    %v254 = vpop.f32.mrf.mxu0
    %v255 = vadd.f32 0.0, %v254
    %256 = vdwg.mxu0
    %257 = vmatpush.msra.mxu0 0.0
    %258 = vmatpush.msra.mxu0 0.0
    %259 = vmatpush.msra.mxu0 0.0
    %260 = vmatpush.msra.mxu0 0.0
    %261 = vmatpush.msra.mxu0 0.0
    %262 = vmatpush.msra.mxu0 0.0
    %263 = vmatpush.msra.mxu0 0.0
    %264 = vmatpush.msra.mxu0 0.0
    %265 = vmatpush.msra.mxu0 0.0
    %v266 = vand.u32 %v191, 4294901760
    %v267 = vsub.f32 %v191, %v266
    %v268 = vand.u32 %v267, 4294901760
    %v269 = vsub.f32 %v267, %v268
    %v270 = vand.u32 %v269, 4294901760
    %271 = vmatpush.msra.mxu0 %v270
    %v272 = vand.u32 %v171, 4294901760
    %v273 = vsub.f32 %v171, %v272
    %v274 = vand.u32 %v273, 4294901760
    %v275 = vsub.f32 %v273, %v274
    %v276 = vand.u32 %v275, 4294901760
    %277 = vmatpush.msra.mxu0 %v276
    %v278 = vand.u32 %v170, 4294901760
    %v279 = vsub.f32 %v170, %v278
    %v280 = vand.u32 %v279, 4294901760
    %v281 = vsub.f32 %v279, %v280
    %v282 = vand.u32 %v281, 4294901760
    %283 = vmatpush.msra.mxu0 %v282
    %v284 = vand.u32 %v169, 4294901760
    %v285 = vsub.f32 %v169, %v284
    %v286 = vand.u32 %v285, 4294901760
    %v287 = vsub.f32 %v285, %v286
    %v288 = vand.u32 %v287, 4294901760
    %289 = vmatpush.msra.mxu0 %v288
    %v290 = vand.u32 %v168, 4294901760
    %v291 = vsub.f32 %v168, %v290
    %v292 = vand.u32 %v291, 4294901760
    %v293 = vsub.f32 %v291, %v292
    %v294 = vand.u32 %v293, 4294901760
    %295 = vmatpush.msra.mxu0 %v294
    %v296 = vand.u32 %v167, 4294901760
    %v297 = vsub.f32 %v167, %v296
    %v298 = vand.u32 %v297, 4294901760
    %v299 = vsub.f32 %v297, %v298
    %v300 = vand.u32 %v299, 4294901760
    %301 = vmatpush.msra.mxu0 %v300
    %v302 = vand.u32 %v166, 4294901760
    %v303 = vsub.f32 %v166, %v302
    %v304 = vand.u32 %v303, 4294901760
    %v305 = vsub.f32 %v303, %v304
    %v306 = vand.u32 %v305, 4294901760
    %307 = vmatpush.msra.mxu0 %v306
    %v308 = vand.u32 %v175, 4294901760
    %309 = vmatmul.f32.gmra.mxu0 %v308
    %v310 = vpop.f32.mrf.mxu0
    %v311 = vadd.f32 %v223, %v310
    %v312 = vand.u32 %v178, 4294901760
    %313 = vmatmul.f32.gmra.mxu0 %v312
    %v314 = vpop.f32.mrf.mxu0
    %v315 = vadd.f32 %v231, %v314
    %v316 = vand.u32 %v181, 4294901760
    %317 = vmatmul.f32.gmra.mxu0 %v316
    %v318 = vpop.f32.mrf.mxu0
    %v319 = vadd.f32 %v239, %v318
    %v320 = vand.u32 %v184, 4294901760
    %321 = vmatmul.f32.gmra.mxu0 %v320
    %v322 = vpop.f32.mrf.mxu0
    %v323 = vadd.f32 %v247, %v322
    %v324 = vand.u32 %v187, 4294901760
    %325 = vmatmul.f32.gmra.mxu0 %v324
    %v326 = vpop.f32.mrf.mxu0
    %v327 = vadd.f32 %v255, %v326
    %328 = vdwg.mxu0
    %329 = vmatpush.msra.mxu0 0.0
    %330 = vmatpush.msra.mxu0 0.0
    %331 = vmatpush.msra.mxu0 0.0
    %332 = vmatpush.msra.mxu0 0.0
    %333 = vmatpush.msra.mxu0 0.0
    %334 = vmatpush.msra.mxu0 0.0
    %335 = vmatpush.msra.mxu0 0.0
    %336 = vmatpush.msra.mxu0 0.0
    %337 = vmatpush.msra.mxu0 0.0
    %v338 = vand.u32 %v191, 4294901760
    %v339 = vsub.f32 %v191, %v338
    %340 = vmatpush.msra.mxu0 %v339
    %v341 = vand.u32 %v171, 4294901760
    %v342 = vsub.f32 %v171, %v341
    %343 = vmatpush.msra.mxu0 %v342
    %v344 = vand.u32 %v170, 4294901760
    %v345 = vsub.f32 %v170, %v344
    %346 = vmatpush.msra.mxu0 %v345
    %v347 = vand.u32 %v169, 4294901760
    %v348 = vsub.f32 %v169, %v347
    %349 = vmatpush.msra.mxu0 %v348
    %v350 = vand.u32 %v168, 4294901760
    %v351 = vsub.f32 %v168, %v350
    %352 = vmatpush.msra.mxu0 %v351
    %v353 = vand.u32 %v167, 4294901760
    %v354 = vsub.f32 %v167, %v353
    %355 = vmatpush.msra.mxu0 %v354
    %v356 = vand.u32 %v166, 4294901760
    %v357 = vsub.f32 %v166, %v356
    %358 = vmatpush.msra.mxu0 %v357
    %v359 = vand.u32 %v175, 4294901760
    %v360 = vsub.f32 %v175, %v359
    %361 = vmatmul.f32.gmra.mxu0 %v360
    %v362 = vpop.f32.mrf.mxu0
    %v363 = vadd.f32 %v311, %v362
    %v364 = vand.u32 %v178, 4294901760
    %v365 = vsub.f32 %v178, %v364
    %366 = vmatmul.f32.gmra.mxu0 %v365
    %v367 = vpop.f32.mrf.mxu0
    %v368 = vadd.f32 %v315, %v367
    %v369 = vand.u32 %v181, 4294901760
    %v370 = vsub.f32 %v181, %v369
    %371 = vmatmul.f32.gmra.mxu0 %v370
    %v372 = vpop.f32.mrf.mxu0
    %v373 = vadd.f32 %v319, %v372
    %v374 = vand.u32 %v184, 4294901760
    %v375 = vsub.f32 %v184, %v374
    %376 = vmatmul.f32.gmra.mxu0 %v375
    %v377 = vpop.f32.mrf.mxu0
    %v378 = vadd.f32 %v323, %v377
    %v379 = vand.u32 %v187, 4294901760
    %v380 = vsub.f32 %v187, %v379
    %381 = vmatmul.f32.gmra.mxu0 %v380
    %v382 = vpop.f32.mrf.mxu0
    %v383 = vadd.f32 %v327, %v382
    %384 = vdwg.mxu0
    %385 = vmatpush.msra.mxu0 0.0
    %386 = vmatpush.msra.mxu0 0.0
    %387 = vmatpush.msra.mxu0 0.0
    %388 = vmatpush.msra.mxu0 0.0
    %389 = vmatpush.msra.mxu0 0.0
    %390 = vmatpush.msra.mxu0 0.0
    %391 = vmatpush.msra.mxu0 0.0
    %392 = vmatpush.msra.mxu0 0.0
    %393 = vmatpush.msra.mxu0 0.0
    %v394 = vand.u32 %v191, 4294901760
    %395 = vmatpush.msra.mxu0 %v394
    %v396 = vand.u32 %v171, 4294901760
    %397 = vmatpush.msra.mxu0 %v396
    %v398 = vand.u32 %v170, 4294901760
    %399 = vmatpush.msra.mxu0 %v398
    %v400 = vand.u32 %v169, 4294901760
    %401 = vmatpush.msra.mxu0 %v400
    %v402 = vand.u32 %v168, 4294901760
    %403 = vmatpush.msra.mxu0 %v402
    %v404 = vand.u32 %v167, 4294901760
    %405 = vmatpush.msra.mxu0 %v404
    %v406 = vand.u32 %v166, 4294901760
    %407 = vmatpush.msra.mxu0 %v406
    %v408 = vand.u32 %v175, 4294901760
    %v409 = vsub.f32 %v175, %v408
    %v410 = vand.u32 %v409, 4294901760
    %411 = vmatmul.f32.gmra.mxu0 %v410
    %v412 = vpop.f32.mrf.mxu0
    %v413 = vadd.f32 %v363, %v412
    %v414 = vand.u32 %v178, 4294901760
    %v415 = vsub.f32 %v178, %v414
    %v416 = vand.u32 %v415, 4294901760
    %417 = vmatmul.f32.gmra.mxu0 %v416
    %v418 = vpop.f32.mrf.mxu0
    %v419 = vadd.f32 %v368, %v418
    %v420 = vand.u32 %v181, 4294901760
    %v421 = vsub.f32 %v181, %v420
    %v422 = vand.u32 %v421, 4294901760
    %423 = vmatmul.f32.gmra.mxu0 %v422
    %v424 = vpop.f32.mrf.mxu0
    %v425 = vadd.f32 %v373, %v424
    %v426 = vand.u32 %v184, 4294901760
    %v427 = vsub.f32 %v184, %v426
    %v428 = vand.u32 %v427, 4294901760
    %429 = vmatmul.f32.gmra.mxu0 %v428
    %v430 = vpop.f32.mrf.mxu0
    %v431 = vadd.f32 %v378, %v430
    %v432 = vand.u32 %v187, 4294901760
    %v433 = vsub.f32 %v187, %v432
    %v434 = vand.u32 %v433, 4294901760
    %435 = vmatmul.f32.gmra.mxu0 %v434
    %v436 = vpop.f32.mrf.mxu0
    %v437 = vadd.f32 %v383, %v436
    %438 = vdwg.mxu0
    %439 = vmatpush.msra.mxu0 0.0
    %440 = vmatpush.msra.mxu0 0.0
    %441 = vmatpush.msra.mxu0 0.0
    %442 = vmatpush.msra.mxu0 0.0
    %443 = vmatpush.msra.mxu0 0.0
    %444 = vmatpush.msra.mxu0 0.0
    %445 = vmatpush.msra.mxu0 0.0
    %446 = vmatpush.msra.mxu0 0.0
    %447 = vmatpush.msra.mxu0 0.0
    %v448 = vand.u32 %v191, 4294901760
    %v449 = vsub.f32 %v191, %v448
    %v450 = vand.u32 %v449, 4294901760
    %451 = vmatpush.msra.mxu0 %v450
    %v452 = vand.u32 %v171, 4294901760
    %v453 = vsub.f32 %v171, %v452
    %v454 = vand.u32 %v453, 4294901760
    %455 = vmatpush.msra.mxu0 %v454
    %v456 = vand.u32 %v170, 4294901760
    %v457 = vsub.f32 %v170, %v456
    %v458 = vand.u32 %v457, 4294901760
    %459 = vmatpush.msra.mxu0 %v458
    %v460 = vand.u32 %v169, 4294901760
    %v461 = vsub.f32 %v169, %v460
    %v462 = vand.u32 %v461, 4294901760
    %463 = vmatpush.msra.mxu0 %v462
    %v464 = vand.u32 %v168, 4294901760
    %v465 = vsub.f32 %v168, %v464
    %v466 = vand.u32 %v465, 4294901760
    %467 = vmatpush.msra.mxu0 %v466
    %v468 = vand.u32 %v167, 4294901760
    %v469 = vsub.f32 %v167, %v468
    %v470 = vand.u32 %v469, 4294901760
    %471 = vmatpush.msra.mxu0 %v470
    %v472 = vand.u32 %v166, 4294901760
    %v473 = vsub.f32 %v166, %v472
    %v474 = vand.u32 %v473, 4294901760
    %475 = vmatpush.msra.mxu0 %v474
    %v476 = vand.u32 %v175, 4294901760
    %477 = vmatmul.f32.gmra.mxu0 %v476
    %v478 = vpop.f32.mrf.mxu0
    %v479 = vadd.f32 %v413, %v478
    %v480 = vand.u32 %v178, 4294901760
    %481 = vmatmul.f32.gmra.mxu0 %v480
    %v482 = vpop.f32.mrf.mxu0
    %v483 = vadd.f32 %v419, %v482
    %v484 = vand.u32 %v181, 4294901760
    %485 = vmatmul.f32.gmra.mxu0 %v484
    %v486 = vpop.f32.mrf.mxu0
    %v487 = vadd.f32 %v425, %v486
    %v488 = vand.u32 %v184, 4294901760
    %489 = vmatmul.f32.gmra.mxu0 %v488
    %v490 = vpop.f32.mrf.mxu0
    %v491 = vadd.f32 %v431, %v490
    %v492 = vand.u32 %v187, 4294901760
    %493 = vmatmul.f32.gmra.mxu0 %v492
    %v494 = vpop.f32.mrf.mxu0
    %v495 = vadd.f32 %v437, %v494
    %496 = vdwg.mxu0
    %497 = vmatpush.msra.mxu0 0.0
    %498 = vmatpush.msra.mxu0 0.0
    %499 = vmatpush.msra.mxu0 0.0
    %500 = vmatpush.msra.mxu0 0.0
    %501 = vmatpush.msra.mxu0 0.0
    %502 = vmatpush.msra.mxu0 0.0
    %503 = vmatpush.msra.mxu0 0.0
    %504 = vmatpush.msra.mxu0 0.0
    %505 = vmatpush.msra.mxu0 0.0
    %v506 = vand.u32 %v191, 4294901760
    %507 = vmatpush.msra.mxu0 %v506
    %v508 = vand.u32 %v171, 4294901760
    %509 = vmatpush.msra.mxu0 %v508
    %v510 = vand.u32 %v170, 4294901760
    %511 = vmatpush.msra.mxu0 %v510
    %v512 = vand.u32 %v169, 4294901760
    %513 = vmatpush.msra.mxu0 %v512
    %v514 = vand.u32 %v168, 4294901760
    %515 = vmatpush.msra.mxu0 %v514
    %v516 = vand.u32 %v167, 4294901760
    %517 = vmatpush.msra.mxu0 %v516
    %v518 = vand.u32 %v166, 4294901760
    %519 = vmatpush.msra.mxu0 %v518
    %v520 = vand.u32 %v175, 4294901760
    %521 = vmatmul.f32.gmra.mxu0 %v520
    %v522 = vpop.f32.mrf.mxu0
    %v523 = vadd.f32 %v479, %v522
    %v524 = vand.u32 %v178, 4294901760
    %525 = vmatmul.f32.gmra.mxu0 %v524
    %v526 = vpop.f32.mrf.mxu0
    %v527 = vadd.f32 %v483, %v526
    %v528 = vand.u32 %v181, 4294901760
    %529 = vmatmul.f32.gmra.mxu0 %v528
    %v530 = vpop.f32.mrf.mxu0
    %v531 = vadd.f32 %v487, %v530
    %v532 = vand.u32 %v184, 4294901760
    %533 = vmatmul.f32.gmra.mxu0 %v532
    %v534 = vpop.f32.mrf.mxu0
    %v535 = vadd.f32 %v491, %v534
    %v536 = vand.u32 %v187, 4294901760
    %537 = vmatmul.f32.gmra.mxu0 %v536
    %v538 = vpop.f32.mrf.mxu0
    %v539 = vadd.f32 %v495, %v538
    %540 = vdwg.mxu0
    %v541 = vmul.f32 %v523, %v523
    %v542 = vmul.f32 %v527, %v527
    %v543 = vmul.f32 %v531, %v531
    %v544 = vmul.f32 %v535, %v535
    %v545 = vadd.f32 %v541, %v542
    %v546 = vadd.f32 %v545, %v543
    %v547 = vadd.f32 %v546, %v544
    %v548 = vrot.slane %v547, 4
    %v549 = vadd.f32 %v547, %v548
    %v550 = vrot.slane %v549, 2
    %v551 = vadd.f32 %v549, %v550
    %v552 = vrot.slane %v551, 1
    %v553 = vadd.f32 %v551, %v552
    %v554 = vsub.f32 %v553, %v539
    %s555 = sld [smem:[#allocation2]]
    %v556 = vstv %s555
    %v557 = vadd.f32 %v539, %v556
    %v558 = vmul.f32 %v554, 0.5
    %v560 = vrot.slane %v558, 1
    %v562 = vadd.f32 %v557, %v560
    %v563 = vxor.u32 %v562, 2147483648
    %v564 = vmul.f32 %v563, 1.442695
    %v565 = vpow.pop %v564
    %v566 = vadd.f32 %v565, 1.0
    %v567 = vrcp.pop %v566
    %v568 = vmul.f32 %v566, %v567
    %v569 = vsub.f32 1.0, %v568
    %v570 = vmul.f32 %v567, %v569
    %v571 = vadd.f32 %v567, %v570
    %vm572 = vweird.f32 %v566
    %vm573 = vweird.f32 %v567
    %vm574 = vmor %vm572, %vm573
    %v575 = vsel %vm574, %v567, %v571
    %v576 = vand.u32 2147483647, %v566
    %vm577 = vcmp.eq.f32.partialorder %v576, 8.507059e+37
    %v578 = vand.u32 %v566, 2147483648
    %v579 = vor.u32 1.1754944e-38, %v578
    %v580 = vsel %vm577, %v579, %v575
    %v581 = vmul.f32 1.0, %v580
    %582 = vst [vmem:[%s4] sm:$0x1] %v581
    // Predicated region
    $region22: #{fm_forward.1} parent=1 // pred_check
      _
    $region23: #{fm_forward.1} parent=1 // pred_check_branch
      %584 = sbr.rel (0) target = $region25
    $region24: #{fm_forward.1} parent=1 // pred_region
      _
    $region25: #{fm_forward.1} parent=1 // pred_fallthru
      _
    // Predicated region
    $region26: #{fm_forward.1} parent=1 // pred_check
      _
    $region27: #{fm_forward.1} parent=1 // pred_check_branch
      %586 = sbr.rel (0) target = $region29
    $region28: #{fm_forward.1} parent=1 // pred_region
      _
    $region29: #{fm_forward.1} parent=1 // pred_fallthru
      _
    %587 = vsyncpa [#allocation4], 1

</llo_original>
